<compile_context>
chip_gen: v5e
topology: v5e:2x2
jax: 0.10.0
libtpu: 0.0.40
codegen_flags: <defaults>
</compile_context>

<pallas_src>
import jax
import jax.numpy as jnp
from jax.experimental import pallas as pl
from jax.experimental.pallas import tpu as pltpu

LANE = 128   # TPU lane width; also the width of the right-halo block.


def _round_up(x, m):
    return (x + m - 1) // m * m


def _cdiv(x, m):
    return -(-x // m)


def _sublane_pack(dtype):
    """Sublane group for a dtype (8 * 32-bit packing): f32 -> 8, bf16 -> 16, int8 -> 32."""
    return 8 * max(1, 4 // jnp.dtype(dtype).itemsize)


def _make_kernel(K, TL, depth, mxu_dtype):
    """One grid step = one (batch, L-tile); channels on sublanes, L on lanes."""

    def kernel(*refs):
        if depth > 1:
            (main_ref, halo_ref, w1_ref, b1_ref,
             wmid_ref, bmid_ref, wend_ref, bend_ref, out_ref) = refs
        else:
            (main_ref, halo_ref, w1_ref, b1_ref,
             wend_ref, bend_ref, out_ref) = refs

        # (CP, TL) tile plus the 128 columns to its right (halo); the wrapper pads
        # the input so both blocks are always fully in bounds.  Everything stays in
        # mxu_dtype end-to-end (no f32 round trip on the slab build).
        # TODO(synk): fetch as a single overlapping (CP, TL+128) element-offset block
        # (pl.Element) once that BlockSpec mode is confirmed on the target jax version.
        ext = jnp.concatenate([main_ref[0], halo_ref[0]], axis=-1)   # (CP, TL+128)

        # im2col slab: slab[k*CP + c, l] = xpad[c, tile_start + l + k].
        # One fused MXU contraction of depth K*CP instead of K shallow matmuls plus
        # K-1 full-tile VPU adds.  Pieces are sublane-pack aligned (CP % pack == 0).
        slab = jnp.concatenate([ext[:, k:k + TL] for k in range(K)], axis=0)
        h = jnp.dot(w1_ref[...], slab,
                    preferred_element_type=jnp.float32)             # (hidden, TL), f32
        h = jnp.maximum(h + b1_ref[...], 0.0)                        # bias + ReLU in f32

        for d in range(depth - 1):                    # 1x1 convs == per-column dense
            h = jnp.dot(wmid_ref[d], h.astype(mxu_dtype),
                        preferred_element_type=jnp.float32)
            h = jnp.maximum(h + bmid_ref[d], 0.0)

        out = jnp.dot(wend_ref[...], h.astype(mxu_dtype),
                      preferred_element_type=jnp.float32) + bend_ref[...]
        out_ref[0] = out.astype(out_ref.dtype)        # lane-dense (C_out, TL) store

    return kernel


def ab_stencil_cnn_forward(x, params, stencil, depth, *, l_tile=2048,
                           mxu_dtype=jnp.bfloat16):
    """x: (B, 1, L, C_in) -> (B, 1, L, C_out); matches the PyTorch module forward."""
    a, b = stencil
    K = a + b + 1
    B, one, L, Cin = x.shape
    assert one == 1, "dim 1 must be squeezable (== 1), as in the PyTorch module"
    assert a + b <= LANE, "halo block assumes a + b <= 128"
    l_tile = max(l_tile, LANE)

    # [review 3] pick the tile count first, then the tile width -> the last tile
    # wastes < 128 output columns of compute/DMA/writeback.
    nLT = _cdiv(L, l_tile)
    # [review 6] v7x has 2 TensorCores; make sure the parallel grid has >= 2 steps.
    if B * nLT < 2:
        nLT = min(2, _cdiv(L, LANE))
    TL = _round_up(_cdiv(L, nLT), LANE)              # output columns per grid step
    nLT = _cdiv(L, TL)
    Lr = nLT * TL                                    # output length rounded to the tile
    Lp = Lr + LANE                                   # padded input length: last halo block
                                                     # [Lr, Lr+128) is always in bounds

    pack = _sublane_pack(mxu_dtype)                  # 16 for bf16, 8 for f32
    CP = _round_up(Cin, pack)                        # channels padded to a packing group

    hidden = params["w1"].shape[-1]
    Cout = params["wend"].shape[-1]

    # One fused XLA prologue copy: squeeze + transpose to (B, Cin, L), zero-pad the
    # channel axis to CP, replicate-pad the L axis, and cast the MXU operand dtype.
    xt = jnp.transpose(x[:, 0], (0, 2, 1)).astype(mxu_dtype)            # (B, Cin, L)
    xt = jnp.pad(xt, ((0, 0), (0, CP - Cin), (0, 0)))                   # zero channels
    xpad = jnp.pad(xt, ((0, 0), (0, 0), (a, Lp - a - L)), mode="edge")  # (B, CP, Lp)

    # Re-orient weights for the (channels, L) layout; biases stay f32 column vectors.
    w1p = jnp.pad(params["w1"], ((0, 0), (0, CP - Cin), (0, 0)))        # (K, CP, hidden)
    w1f = w1p.reshape(K * CP, hidden).T.astype(mxu_dtype)               # (hidden, K*CP)
    b1 = params["b1"].reshape(hidden, 1).astype(jnp.float32)
    wend = params["wend"].T.astype(mxu_dtype)                           # (Cout, hidden)
    bend = params["bend"].reshape(Cout, 1).astype(jnp.float32)

    # TODO(synk): single-buffer the constant weight/bias blocks (pipeline_mode=
    # pl.Buffered(1)) before hidden/depth scale up; negligible at hidden=32.
    in_specs = [
        pl.BlockSpec((1, CP, TL), lambda i, j: (i, 0, j)),              # main input tile
        pl.BlockSpec((1, CP, LANE),                                     # right halo block
                     lambda i, j: (i, 0, (j + 1) * (TL // LANE))),
        pl.BlockSpec((hidden, K * CP), lambda i, j: (0, 0)),            # conv1 weight
        pl.BlockSpec((hidden, 1), lambda i, j: (0, 0)),                 # conv1 bias
    ]
    inputs = [xpad, xpad, w1f, b1]
    if depth > 1:                 # skip the hidden-layer weights entirely when unused
        Dm = depth - 1
        wmid = jnp.transpose(params["wmid"][:Dm], (0, 2, 1)).astype(mxu_dtype)
        bmid = params["bmid"][:Dm][..., None].astype(jnp.float32)       # (Dm, hidden, 1)
        in_specs += [pl.BlockSpec((Dm, hidden, hidden), lambda i, j: (0, 0, 0)),
                     pl.BlockSpec((Dm, hidden, 1), lambda i, j: (0, 0, 0))]
        inputs += [wmid, bmid]
    in_specs += [pl.BlockSpec((Cout, hidden), lambda i, j: (0, 0)),     # fc_end weight
                 pl.BlockSpec((Cout, 1), lambda i, j: (0, 0))]          # fc_end bias
    inputs += [wend, bend]

    out = pl.pallas_call(
        _make_kernel(K, TL, depth, mxu_dtype),
        out_shape=jax.ShapeDtypeStruct((B, Cout, Lr), jnp.float32),
        grid_spec=pltpu.PrefetchScalarGridSpec(
            num_scalar_prefetch=0,
            grid=(B, nLT),
            in_specs=in_specs,
            out_specs=pl.BlockSpec((1, Cout, TL), lambda i, j: (i, 0, j)),
        ),
        compiler_params=pltpu.CompilerParams(
            dimension_semantics=("parallel", "parallel"),
        ),
    )(*inputs)

    # The kernel's natural layout is (B, Cout, L); the slice + transpose below exist
    # only to match the PyTorch module's (B, 1, L, C_out) output and can be dropped /
    # fused into the consumer when that layout is acceptable (review item 9).
    out = out[:, :, :L]
    return jnp.transpose(out, (0, 2, 1))[:, None].astype(x.dtype)


def init_params(key, stencil, hidden, depth, in_channels, out_channels,
                dtype=jnp.float32):
    """Deterministic PyTorch-style init (U(-1/sqrt(fan_in), 1/sqrt(fan_in)))."""
    a, b = stencil
    K = a + b + 1
    ks = jax.random.split(key, 6)

    def unif(k, shape, fan_in):
        s = 1.0 / float(fan_in) ** 0.5
        return jax.random.uniform(k, shape, dtype, -s, s)

    Dm = max(depth - 1, 1)  # keep a static slab even if unused (never passed if depth==1)
    if depth > 1:
        wmid = unif(ks[2], (Dm, hidden, hidden), hidden)
        bmid = unif(ks[3], (Dm, hidden), hidden)
    else:
        wmid = jnp.zeros((Dm, hidden, hidden), dtype)
        bmid = jnp.zeros((Dm, hidden), dtype)

    return dict(
        w1=unif(ks[0], (K, in_channels, hidden), K * in_channels),
        b1=unif(ks[1], (1, hidden), K * in_channels),
        wmid=wmid,
        bmid=bmid,
        wend=unif(ks[4], (hidden, out_channels), hidden),
        bend=unif(ks[5], (1, out_channels), hidden),
    )


def reference(x, params, stencil, depth):
    """Pure-JAX (f32) reference of the PyTorch forward, for correctness checking."""
    a, b = stencil
    K = a + b + 1
    L = x.shape[2]
    xp = jnp.concatenate(
        [jnp.repeat(x[:, :, :1], a, axis=2), x, jnp.repeat(x[:, :, -1:], b, axis=2)],
        axis=2)[:, 0]                                        # (B, L+a+b, Cin)
    cols = jnp.stack([xp[:, k:k + L, :] for k in range(K)], axis=2)  # (B, L, K, Cin)
    h = jnp.einsum("blkc,kch->blh", cols, params["w1"]) + params["b1"]
    h = jnp.maximum(h, 0.0)
    for d in range(depth - 1):
        h = jnp.maximum(h @ params["wmid"][d] + params["bmid"][d], 0.0)
    out = h @ params["wend"] + params["bend"]
    return out[:, None]                                      # (B, 1, L, Cout)


if __name__ == "__main__":
    stencil = (2, 3)             # (a, b) -> kernel_size = 6
    B, L = 2, 16
    in_channels, out_channels = 3, 2
    hidden, depth = 32, 2

    key = jax.random.PRNGKey(0)
    kx, kp, kp1 = jax.random.split(key, 3)
    x = jax.random.normal(kx, (B, 1, L, in_channels), jnp.float32)
    params = init_params(kp, stencil, hidden, depth, in_channels, out_channels)
    ref = reference(x, params, stencil, depth)

    # Full-precision MXU path: must match the f32 JAX reference tightly.
    out_f32 = jax.block_until_ready(
        ab_stencil_cnn_forward(x, params, stencil, depth, mxu_dtype=jnp.float32))
    assert out_f32.shape == (B, 1, L, out_channels), out_f32.shape
    assert jnp.allclose(out_f32, ref, atol=2e-5, rtol=2e-5), "f32 mismatch vs reference"

    # Default bf16-MXU path (f32 accumulation / bias / ReLU).
    out_bf16 = jax.block_until_ready(ab_stencil_cnn_forward(x, params, stencil, depth))
    assert jnp.allclose(out_bf16, ref, atol=5e-2, rtol=5e-2), "bf16 mismatch vs reference"

    # depth == 1 path (no hidden 1x1 layer weights are passed to the kernel at all).
    params1 = init_params(kp1, stencil, hidden, 1, in_channels, out_channels)
    out_d1 = jax.block_until_ready(
        ab_stencil_cnn_forward(x, params1, stencil, 1, mxu_dtype=jnp.float32))
    assert jnp.allclose(out_d1, reference(x, params1, stencil, 1),
                        atol=2e-5, rtol=2e-5), "depth=1 mismatch vs reference"

    print("KERNEL_OK")
</pallas_src>

<mosaic_0001>
module attributes {stable_mosaic.version = 11 : i64} {
  func.func @kernel(%arg0: i32, %arg1: i32, %arg2: memref<1x8x128xf32, #tpu.memory_space<vmem>>, %arg3: memref<1x8x128xf32, #tpu.memory_space<vmem>>, %arg4: memref<32x48xf32, #tpu.memory_space<vmem>>, %arg5: memref<32x1xf32, #tpu.memory_space<vmem>>, %arg6: memref<1x32x32xf32, #tpu.memory_space<vmem>>, %arg7: memref<1x32x1xf32, #tpu.memory_space<vmem>>, %arg8: memref<2x32xf32, #tpu.memory_space<vmem>>, %arg9: memref<2x1xf32, #tpu.memory_space<vmem>>, %arg10: memref<1x2x128xf32, #tpu.memory_space<vmem>>) attributes {dimension_semantics = [#tpu.dimension_semantics<parallel>, #tpu.dimension_semantics<parallel>], iteration_bounds = array<i64: 2, 1>, scalar_prefetch = 0 : i64, scratch_operands = 0 : i64, tpu.core_type = #tpu.core_type<tc>, window_params = [{transform_indices = @transform_0, window_bounds = array<i64: 1, 8, 128>}, {transform_indices = @transform_1, window_bounds = array<i64: 1, 8, 128>}, {pipeline_mode = #tpu.pipeline_mode<synchronous>, transform_indices = @transform_2, window_bounds = array<i64: 32, 48>}, {pipeline_mode = #tpu.pipeline_mode<synchronous>, transform_indices = @transform_3, window_bounds = array<i64: 32, 1>}, {pipeline_mode = #tpu.pipeline_mode<synchronous>, transform_indices = @transform_4, window_bounds = array<i64: 1, 32, 32>}, {pipeline_mode = #tpu.pipeline_mode<synchronous>, transform_indices = @transform_5, window_bounds = array<i64: 1, 32, 1>}, {pipeline_mode = #tpu.pipeline_mode<synchronous>, transform_indices = @transform_6, window_bounds = array<i64: 2, 32>}, {pipeline_mode = #tpu.pipeline_mode<synchronous>, transform_indices = @transform_7, window_bounds = array<i64: 2, 1>}, {transform_indices = @transform_8, window_bounds = array<i64: 1, 2, 128>}]} {
    %c0 = arith.constant 0 : index
    %c0_0 = arith.constant 0 : index
    %c0_1 = arith.constant 0 : index
    %0 = vector.load %arg2[%c0, %c0_0, %c0_1] : memref<1x8x128xf32, #tpu.memory_space<vmem>>, vector<1x8x128xf32>
    %1 = vector.shape_cast %0 : vector<1x8x128xf32> to vector<8x128xf32>
    %c0_2 = arith.constant 0 : index
    %c0_3 = arith.constant 0 : index
    %c0_4 = arith.constant 0 : index
    %2 = vector.load %arg3[%c0_2, %c0_3, %c0_4] : memref<1x8x128xf32, #tpu.memory_space<vmem>>, vector<1x8x128xf32>
    %3 = vector.shape_cast %2 : vector<1x8x128xf32> to vector<8x128xf32>
    %4 = tpu.concatenate %1, %3 in 1 : vector<8x128xf32>, vector<8x128xf32> -> vector<8x256xf32>
    %5 = vector.extract_strided_slice %4 {offsets = [0, 0], sizes = [8, 128], strides = [1, 1]} : vector<8x256xf32> to vector<8x128xf32>
    %6 = vector.extract_strided_slice %4 {offsets = [0, 1], sizes = [8, 128], strides = [1, 1]} : vector<8x256xf32> to vector<8x128xf32>
    %7 = vector.extract_strided_slice %4 {offsets = [0, 2], sizes = [8, 128], strides = [1, 1]} : vector<8x256xf32> to vector<8x128xf32>
    %8 = vector.extract_strided_slice %4 {offsets = [0, 3], sizes = [8, 128], strides = [1, 1]} : vector<8x256xf32> to vector<8x128xf32>
    %9 = vector.extract_strided_slice %4 {offsets = [0, 4], sizes = [8, 128], strides = [1, 1]} : vector<8x256xf32> to vector<8x128xf32>
    %10 = vector.extract_strided_slice %4 {offsets = [0, 5], sizes = [8, 128], strides = [1, 1]} : vector<8x256xf32> to vector<8x128xf32>
    %11 = tpu.concatenate %5, %6, %7, %8, %9, %10 in 0 : vector<8x128xf32>, vector<8x128xf32>, vector<8x128xf32>, vector<8x128xf32>, vector<8x128xf32>, vector<8x128xf32> -> vector<48x128xf32>
    %c0_5 = arith.constant 0 : index
    %c0_6 = arith.constant 0 : index
    %12 = vector.load %arg4[%c0_5, %c0_6] : memref<32x48xf32, #tpu.memory_space<vmem>>, vector<32x48xf32>
    %cst = arith.constant dense<0.000000e+00> : vector<32x128xf32>
    %13 = tpu.matmul %12, %11, %cst {dimension_numbers = #tpu.dot_dimension_numbers<[1], [0], [0], [1], [0, 0, 1, 1], [], []>} : vector<32x48xf32>, vector<48x128xf32>, vector<32x128xf32> -> vector<32x128xf32>
    %c0_7 = arith.constant 0 : index
    %c0_8 = arith.constant 0 : index
    %14 = vector.load %arg5[%c0_7, %c0_8] : memref<32x1xf32, #tpu.memory_space<vmem>>, vector<32x1xf32>
    %15 = vector.broadcast %14 : vector<32x1xf32> to vector<32x128xf32>
    %16 = arith.addf %13, %15 : vector<32x128xf32>
    %cst_9 = arith.constant 0.000000e+00 : f32
    %17 = vector.broadcast %cst_9 : f32 to vector<32x128xf32>
    %18 = arith.maximumf %16, %17 : vector<32x128xf32>
    %c0_10 = arith.constant 0 : index
    %c0_11 = arith.constant 0 : index
    %c0_12 = arith.constant 0 : index
    %19 = vector.load %arg6[%c0_10, %c0_11, %c0_12] : memref<1x32x32xf32, #tpu.memory_space<vmem>>, vector<1x32x32xf32>
    %20 = vector.shape_cast %19 : vector<1x32x32xf32> to vector<32x32xf32>
    %cst_13 = arith.constant dense<0.000000e+00> : vector<32x128xf32>
    %21 = tpu.matmul %20, %18, %cst_13 {dimension_numbers = #tpu.dot_dimension_numbers<[1], [0], [0], [1], [0, 0, 1, 1], [], []>} : vector<32x32xf32>, vector<32x128xf32>, vector<32x128xf32> -> vector<32x128xf32>
    %c0_14 = arith.constant 0 : index
    %c0_15 = arith.constant 0 : index
    %c0_16 = arith.constant 0 : index
    %22 = vector.load %arg7[%c0_14, %c0_15, %c0_16] : memref<1x32x1xf32, #tpu.memory_space<vmem>>, vector<1x32x1xf32>
    %23 = vector.shape_cast %22 : vector<1x32x1xf32> to vector<32x1xf32>
    %24 = vector.broadcast %23 : vector<32x1xf32> to vector<32x128xf32>
    %25 = arith.addf %21, %24 : vector<32x128xf32>
    %cst_17 = arith.constant 0.000000e+00 : f32
    %26 = vector.broadcast %cst_17 : f32 to vector<32x128xf32>
    %27 = arith.maximumf %25, %26 : vector<32x128xf32>
    %c0_18 = arith.constant 0 : index
    %c0_19 = arith.constant 0 : index
    %28 = vector.load %arg8[%c0_18, %c0_19] : memref<2x32xf32, #tpu.memory_space<vmem>>, vector<2x32xf32>
    %cst_20 = arith.constant dense<0.000000e+00> : vector<2x128xf32>
    %29 = tpu.matmul %28, %27, %cst_20 {dimension_numbers = #tpu.dot_dimension_numbers<[1], [0], [0], [1], [0, 0, 1, 1], [], []>} : vector<2x32xf32>, vector<32x128xf32>, vector<2x128xf32> -> vector<2x128xf32>
    %c0_21 = arith.constant 0 : index
    %c0_22 = arith.constant 0 : index
    %30 = vector.load %arg9[%c0_21, %c0_22] : memref<2x1xf32, #tpu.memory_space<vmem>>, vector<2x1xf32>
    %31 = vector.broadcast %30 : vector<2x1xf32> to vector<2x128xf32>
    %32 = arith.addf %29, %31 : vector<2x128xf32>
    %c0_23 = arith.constant 0 : index
    %c0_24 = arith.constant 0 : index
    %c0_25 = arith.constant 0 : index
    %33 = vector.load %arg10[%c0_23, %c0_24, %c0_25] : memref<1x2x128xf32, #tpu.memory_space<vmem>>, vector<1x2x128xf32>
    %34 = vector.shape_cast %33 : vector<1x2x128xf32> to vector<2x128xf32>
    %35 = vector.shape_cast %32 : vector<2x128xf32> to vector<1x2x128xf32>
    tpu.vector_store %arg10[%c0_23, %c0_24, %c0_25], %35 {strides = array<i32>} : memref<1x2x128xf32, #tpu.memory_space<vmem>>, vector<1x2x128xf32>,
    return
  }
  func.func @transform_0(%arg0: i32, %arg1: i32) -> (i32, i32, i32) {
    %c0_i32 = arith.constant 0 : i32
    %c0_i32_0 = arith.constant 0 : i32
    return %arg0, %c0_i32, %arg1 : i32, i32, i32
  }
  func.func @transform_1(%arg0: i32, %arg1: i32) -> (i32, i32, i32) {
    %c1_i32 = arith.constant 1 : i32
    %0 = arith.addi %arg1, %c1_i32 : i32
    %c1_i32_0 = arith.constant 1 : i32
    %1 = arith.muli %0, %c1_i32_0 : i32
    %c0_i32 = arith.constant 0 : i32
    %c0_i32_1 = arith.constant 0 : i32
    return %arg0, %c0_i32, %1 : i32, i32, i32
  }
  func.func @transform_2(%arg0: i32, %arg1: i32) -> (i32, i32) {
    %c0_i32 = arith.constant 0 : i32
    %c0_i32_0 = arith.constant 0 : i32
    %c0_i32_1 = arith.constant 0 : i32
    return %c0_i32, %c0_i32_0 : i32, i32
  }
  func.func @transform_3(%arg0: i32, %arg1: i32) -> (i32, i32) {
    %c0_i32 = arith.constant 0 : i32
    %c0_i32_0 = arith.constant 0 : i32
    %c0_i32_1 = arith.constant 0 : i32
    return %c0_i32, %c0_i32_0 : i32, i32
  }
  func.func @transform_4(%arg0: i32, %arg1: i32) -> (i32, i32, i32) {
    %c0_i32 = arith.constant 0 : i32
    %c0_i32_0 = arith.constant 0 : i32
    %c0_i32_1 = arith.constant 0 : i32
    %c0_i32_2 = arith.constant 0 : i32
    return %c0_i32, %c0_i32_0, %c0_i32_1 : i32, i32, i32
  }
  func.func @transform_5(%arg0: i32, %arg1: i32) -> (i32, i32, i32) {
    %c0_i32 = arith.constant 0 : i32
    %c0_i32_0 = arith.constant 0 : i32
    %c0_i32_1 = arith.constant 0 : i32
    %c0_i32_2 = arith.constant 0 : i32
    return %c0_i32, %c0_i32_0, %c0_i32_1 : i32, i32, i32
  }
  func.func @transform_6(%arg0: i32, %arg1: i32) -> (i32, i32) {
    %c0_i32 = arith.constant 0 : i32
    %c0_i32_0 = arith.constant 0 : i32
    %c0_i32_1 = arith.constant 0 : i32
    return %c0_i32, %c0_i32_0 : i32, i32
  }
  func.func @transform_7(%arg0: i32, %arg1: i32) -> (i32, i32) {
    %c0_i32 = arith.constant 0 : i32
    %c0_i32_0 = arith.constant 0 : i32
    %c0_i32_1 = arith.constant 0 : i32
    return %c0_i32, %c0_i32_0 : i32, i32
  }
  func.func @transform_8(%arg0: i32, %arg1: i32) -> (i32, i32, i32) {
    %c0_i32 = arith.constant 0 : i32
    %c0_i32_0 = arith.constant 0 : i32
    return %arg0, %c0_i32, %arg1 : i32, i32, i32
  }
}

</mosaic_0001>

<llo_original>
// kernel: tpu_custom_call.1
$region0: #{tpu_custom_call.1}
  #allocation0 [shape = 'u32[]', space=smem, size = 0x4, offset = 0x4, fixed_abs, tag = 'smem constant byte address 0x4 - core index']
  #allocation1 [shape = 'u32[72,128]{1,0:T(1,128)}', space=vmem, size = 0x9000, scoped, tag = 'internal scratch']
  %s0 = inlined_call_operand.vmem [shape: f32[2,8,256], index: 0, kind: input, shape index: {}]
  %s1 = inlined_call_operand.vmem [shape: f32[2,8,256], index: 1, kind: input, shape index: {}]
  %s2 = inlined_call_operand.hbm [shape: f32[32,48], index: 2, kind: input, shape index: {}]
  %s3 = inlined_call_operand.vmem [shape: f32[32,1], index: 3, kind: input, shape index: {}]
  %s4 = inlined_call_operand.hbm [shape: f32[1,32,32], index: 4, kind: input, shape index: {}]
  %s5 = inlined_call_operand.vmem [shape: f32[1,32,1], index: 5, kind: input, shape index: {}]
  %s6 = inlined_call_operand.vmem [shape: f32[2,32], index: 6, kind: input, shape index: {}]
  %s7 = inlined_call_operand.vmem [shape: f32[2,1], index: 7, kind: input, shape index: {}]
  %s8 = inlined_call_operand.hbm [shape: f32[2,2,128], index: 8, kind: output, shape index: {}]
  %s9 = sld [smem:[#allocation0]]
  $region73: #{tpu_custom_call.1} parent=0
    _
  %s11 = ssub.s32 1, %s9
  %s12 = scalar_select 0, %s11, %s9
  $region1: #{tpu_custom_call.1} parent=0
    #allocation2 [shape = 'u8[16384]{0}', space=vmem, size = 0x4000, scoped, tag = 'input window, operand 2, single buffered']
    #allocation3 [shape = 's32[2]{0}', space=sflag, size = 0x8, scoped, tag = 'scoped memory for tpu_custom_call.1']
    #allocation4 [shape = 's32[2]{0}', space=sflag, size = 0x8, scoped, tag = 'scoped memory for tpu_custom_call.1']
    #allocation5 [shape = 'u8[16384]{0}', space=vmem, size = 0x4000, scoped, tag = 'input window, operand 4, single buffered']
    #allocation6 [shape = 's32[1]{0}', space=sflag, size = 0x4, scoped, tag = 'scoped memory for tpu_custom_call.1']
    #allocation7 [shape = 'u8[2048]{0}', space=vmem, size = 0x800, scoped, tag = 'output window, operand 0']
    %13 = vsyncpa [#allocation3], 0
    %14 = vsyncpa [#allocation6], 0
    %15 = vsyncpa [#allocation4], 0
    %s16 = scalar_lea.sflag [#allocation4], 1
    %17 = vsyncpa %s16, 0
    loop: start=0, step=1, limit=4
    $region2: #{tpu_custom_call.1} parent=1 // loop_pre_header
      _
    $region3: #{tpu_custom_call.1} parent=1 // loop_header
      %s19 = sphi 0, %s23
      %p20 = scmp.ge.s32.totalorder %s19, 4
      %s26 = sphi 0, %s38
      %s27 = sphi 0, %s34
      %s28 = sphi 0, %s26
      %s29 = sphi 0, %s27
      %s30 = sphi 0, %s28
      %s31 = sphi 0, %s29
      %s43 = sphi 0, %s45
      %s46 = sphi 0, %s43
      %s47 = sphi 0, %s46
      %s63 = sphi 0, %s47
      %s73 = sphi 0, %s75
      %s76 = sphi 0, %s73
      %s77 = sphi 0, %s76
      %s93 = sphi 0, %s77
      %s97 = sphi 0, %s97
      %s99 = sphi 0, %s97
      %s100 = sphi 0, %s99
      %s114 = sphi 0, %s100
      %s118 = sphi 0, %s118
      %s120 = sphi 0, %s118
      %s121 = sphi 0, %s120
      %s135 = sphi 0, %s121
      %s139 = sphi 0, %s139
      %s141 = sphi 0, %s139
      %s142 = sphi 0, %s141
      %s156 = sphi 0, %s142
      %s160 = sphi 0, %s160
      %s162 = sphi 0, %s160
      %s163 = sphi 0, %s162
      %s177 = sphi 0, %s163
      %s181 = sphi 0, %s181
      %s183 = sphi 0, %s181
      %s184 = sphi 0, %s183
      %s198 = sphi 0, %s184
      %s202 = sphi 0, %s202
      %s204 = sphi 0, %s202
      %s205 = sphi 0, %s204
      %s219 = sphi 0, %s205
      %s227 = sphi 0, %s229
      %s230 = sphi 0, %s227
      %s231 = sphi 0, %s230
      %s247 = sphi 0, %s231
    $region4: #{tpu_custom_call.1} parent=1 // loop_header_branch
      %22 = sbr.rel (%p20) target = $region8
    $region5: #{tpu_custom_call.1} parent=1 // loop_body
      %s24 = ssub.s32 %s19, 1
      %s25 = ssub.s32 %s19, 2
      %s32 = sadd.s32 1, %s27
      %p33 = scmp.ge.s32.totalorder %s32, 1
      %s34 = scalar_select %p33, 0, %s32
      %s35 = sadd.s32 1, %s26
      %s36 = scalar_select %p33, %s35, %s26
      %p37 = scmp.ge.s32.totalorder %s36, 2
      %s38 = scalar_select %p37, 0, %s36
      %s39 = ssub.s32 %s26, %s38
      %s40 = ssub.s32 %s27, %s34
      %s41 = sor.u32 %s39, %s40
      %p42 = scmp.eq.s32.totalorder %s41, 0
      %s44 = sadd.s32 %s43, 1
      %s45 = scalar_select %p42, %s43, %s44
      %p48 = pneg %p42
      %p49 = scmp.eq.s32.totalorder %s19, 1
      %p50 = por %p48, %p49
      %p51 = scmp.ne.s32.totalorder %s43, %s46
      %p52 = scmp.eq.s32.totalorder %s19, 0
      %p53 = por %p51, %p52
      %p54 = scmp.ne.s32.totalorder %s43, %s46
      %p55 = scmp.eq.s32.totalorder %s24, 1
      %p56 = por %p54, %p55
      %p57 = scmp.ne.s32.totalorder %s46, %s47
      %p58 = scmp.eq.s32.totalorder %s24, 0
      %p59 = por %p57, %p58
      %p60 = scmp.ne.s32.totalorder %s46, %s47
      %p61 = scmp.eq.s32.totalorder %s25, 1
      %p62 = por %p60, %p61
      %p64 = scmp.ne.s32.totalorder %s47, %s63
      %p65 = scmp.eq.s32.totalorder %s25, 0
      %p66 = por %p64, %p65
      %s67 = sadd.s32 %s27, 1
      %s68 = sadd.s32 %s34, 1
      %s69 = ssub.s32 %s26, %s38
      %s70 = ssub.s32 %s67, %s68
      %s71 = sor.u32 %s69, %s70
      %p72 = scmp.eq.s32.totalorder %s71, 0
      %s74 = sadd.s32 %s73, 1
      %s75 = scalar_select %p72, %s73, %s74
      %p78 = pneg %p72
      %p79 = scmp.eq.s32.totalorder %s19, 1
      %p80 = por %p78, %p79
      %p81 = scmp.ne.s32.totalorder %s73, %s76
      %p82 = scmp.eq.s32.totalorder %s19, 0
      %p83 = por %p81, %p82
      %p84 = scmp.ne.s32.totalorder %s73, %s76
      %p85 = scmp.eq.s32.totalorder %s24, 1
      %p86 = por %p84, %p85
      %p87 = scmp.ne.s32.totalorder %s76, %s77
      %p88 = scmp.eq.s32.totalorder %s24, 0
      %p89 = por %p87, %p88
      %p90 = scmp.ne.s32.totalorder %s76, %s77
      %p91 = scmp.eq.s32.totalorder %s25, 1
      %p92 = por %p90, %p91
      %p94 = scmp.ne.s32.totalorder %s77, %s93
      %p95 = scmp.eq.s32.totalorder %s25, 0
      %p96 = por %p94, %p95
      %s98 = sadd.s32 %s97, 1
      %p101 = scmp.eq.s32.totalorder %s19, 1
      %p102 = scmp.ne.s32.totalorder %s97, %s99
      %p103 = scmp.eq.s32.totalorder %s19, 0
      %p104 = por %p102, %p103
      %p105 = scmp.ne.s32.totalorder %s97, %s99
      %p106 = scmp.eq.s32.totalorder %s24, 1
      %p107 = por %p105, %p106
      %p108 = scmp.ne.s32.totalorder %s99, %s100
      %p109 = scmp.eq.s32.totalorder %s24, 0
      %p110 = por %p108, %p109
      %p111 = scmp.ne.s32.totalorder %s99, %s100
      %p112 = scmp.eq.s32.totalorder %s25, 1
      %p113 = por %p111, %p112
      %p115 = scmp.ne.s32.totalorder %s100, %s114
      %p116 = scmp.eq.s32.totalorder %s25, 0
      %p117 = por %p115, %p116
      %s119 = sadd.s32 %s118, 1
      %p122 = scmp.eq.s32.totalorder %s19, 1
      %p123 = scmp.ne.s32.totalorder %s118, %s120
      %p124 = scmp.eq.s32.totalorder %s19, 0
      %p125 = por %p123, %p124
      %p126 = scmp.ne.s32.totalorder %s118, %s120
      %p127 = scmp.eq.s32.totalorder %s24, 1
      %p128 = por %p126, %p127
      %p129 = scmp.ne.s32.totalorder %s120, %s121
      %p130 = scmp.eq.s32.totalorder %s24, 0
      %p131 = por %p129, %p130
      %p132 = scmp.ne.s32.totalorder %s120, %s121
      %p133 = scmp.eq.s32.totalorder %s25, 1
      %p134 = por %p132, %p133
      %p136 = scmp.ne.s32.totalorder %s121, %s135
      %p137 = scmp.eq.s32.totalorder %s25, 0
      %p138 = por %p136, %p137
      %s140 = sadd.s32 %s139, 1
      %p143 = scmp.eq.s32.totalorder %s19, 1
      %p144 = scmp.ne.s32.totalorder %s139, %s141
      %p145 = scmp.eq.s32.totalorder %s19, 0
      %p146 = por %p144, %p145
      %p147 = scmp.ne.s32.totalorder %s139, %s141
      %p148 = scmp.eq.s32.totalorder %s24, 1
      %p149 = por %p147, %p148
      %p150 = scmp.ne.s32.totalorder %s141, %s142
      %p151 = scmp.eq.s32.totalorder %s24, 0
      %p152 = por %p150, %p151
      %p153 = scmp.ne.s32.totalorder %s141, %s142
      %p154 = scmp.eq.s32.totalorder %s25, 1
      %p155 = por %p153, %p154
      %p157 = scmp.ne.s32.totalorder %s142, %s156
      %p158 = scmp.eq.s32.totalorder %s25, 0
      %p159 = por %p157, %p158
      %s161 = sadd.s32 %s160, 1
      %p164 = scmp.eq.s32.totalorder %s19, 1
      %p165 = scmp.ne.s32.totalorder %s160, %s162
      %p166 = scmp.eq.s32.totalorder %s19, 0
      %p167 = por %p165, %p166
      %p168 = scmp.ne.s32.totalorder %s160, %s162
      %p169 = scmp.eq.s32.totalorder %s24, 1
      %p170 = por %p168, %p169
      %p171 = scmp.ne.s32.totalorder %s162, %s163
      %p172 = scmp.eq.s32.totalorder %s24, 0
      %p173 = por %p171, %p172
      %p174 = scmp.ne.s32.totalorder %s162, %s163
      %p175 = scmp.eq.s32.totalorder %s25, 1
      %p176 = por %p174, %p175
      %p178 = scmp.ne.s32.totalorder %s163, %s177
      %p179 = scmp.eq.s32.totalorder %s25, 0
      %p180 = por %p178, %p179
      %s182 = sadd.s32 %s181, 1
      %p185 = scmp.eq.s32.totalorder %s19, 1
      %p186 = scmp.ne.s32.totalorder %s181, %s183
      %p187 = scmp.eq.s32.totalorder %s19, 0
      %p188 = por %p186, %p187
      %p189 = scmp.ne.s32.totalorder %s181, %s183
      %p190 = scmp.eq.s32.totalorder %s24, 1
      %p191 = por %p189, %p190
      %p192 = scmp.ne.s32.totalorder %s183, %s184
      %p193 = scmp.eq.s32.totalorder %s24, 0
      %p194 = por %p192, %p193
      %p195 = scmp.ne.s32.totalorder %s183, %s184
      %p196 = scmp.eq.s32.totalorder %s25, 1
      %p197 = por %p195, %p196
      %p199 = scmp.ne.s32.totalorder %s184, %s198
      %p200 = scmp.eq.s32.totalorder %s25, 0
      %p201 = por %p199, %p200
      %s203 = sadd.s32 %s202, 1
      %p206 = scmp.eq.s32.totalorder %s19, 1
      %p207 = scmp.ne.s32.totalorder %s202, %s204
      %p208 = scmp.eq.s32.totalorder %s19, 0
      %p209 = por %p207, %p208
      %p210 = scmp.ne.s32.totalorder %s202, %s204
      %p211 = scmp.eq.s32.totalorder %s24, 1
      %p212 = por %p210, %p211
      %p213 = scmp.ne.s32.totalorder %s204, %s205
      %p214 = scmp.eq.s32.totalorder %s24, 0
      %p215 = por %p213, %p214
      %p216 = scmp.ne.s32.totalorder %s204, %s205
      %p217 = scmp.eq.s32.totalorder %s25, 1
      %p218 = por %p216, %p217
      %p220 = scmp.ne.s32.totalorder %s205, %s219
      %p221 = scmp.eq.s32.totalorder %s25, 0
      %p222 = por %p220, %p221
      %s223 = ssub.s32 %s26, %s38
      %s224 = ssub.s32 %s27, %s34
      %s225 = sor.u32 %s223, %s224
      %p226 = scmp.eq.s32.totalorder %s225, 0
      %s228 = sadd.s32 %s227, 1
      %s229 = scalar_select %p226, %s227, %s228
      %p232 = pneg %p226
      %p233 = scmp.eq.s32.totalorder %s19, 1
      %p234 = por %p232, %p233
      %p235 = scmp.ne.s32.totalorder %s227, %s230
      %p236 = scmp.eq.s32.totalorder %s19, 0
      %p237 = por %p235, %p236
      %p238 = scmp.ne.s32.totalorder %s227, %s230
      %p239 = scmp.eq.s32.totalorder %s24, 1
      %p240 = por %p238, %p239
      %p241 = scmp.ne.s32.totalorder %s230, %s231
      %p242 = scmp.eq.s32.totalorder %s24, 0
      %p243 = por %p241, %p242
      %p244 = scmp.ne.s32.totalorder %s230, %s231
      %p245 = scmp.eq.s32.totalorder %s25, 1
      %p246 = por %p244, %p245
      %p248 = scmp.ne.s32.totalorder %s231, %s247
      %p249 = scmp.eq.s32.totalorder %s25, 0
      %p250 = por %p248, %p249
      %p251 = scmp.le.s32.totalorder 1, %s19
      %p252 = scmp.lt.s32.totalorder %s19, 3
      %p253 = pnand %p251, %p252
      %p254 = pneg %p253
      // Predicated region
      $region9: #{tpu_custom_call.1} parent=5 // pred_check
        _
      $region10: #{tpu_custom_call.1} parent=5 // pred_check_branch
        %256 = sbr.rel (%p253) target = $region12
      $region11: #{tpu_custom_call.1} parent=5 // pred_region
        %s257 = ssub.s32 %s19, 1
        // Predicated region
        $region13: #{tpu_custom_call.1} parent=11 // pred_check
          %p258 = pneg %p110
        $region14: #{tpu_custom_call.1} parent=11 // pred_check_branch
          %260 = sbr.rel (%p258) target = $region16
        $region15: #{tpu_custom_call.1} parent=11 // pred_region
          %262 = vsyncadd [#allocation3], 0
          %s263 = sshll.u32 %s2, 4
          %s264 = int_to_ptr.hbm [resolvable:$true] %s263
          %s265 = sshll.u32 [#allocation2], 4
          %s266 = int_to_ptr.vmem [resolvable:$true] %s265
          %271 = dma.hbm_to_vmem [thread:$0]  %s264, 512, %s266, [#allocation3], 128, 128, 8
        $region16: #{tpu_custom_call.1} parent=11 // pred_fallthru
          _
        // Predicated region
        $region17: #{tpu_custom_call.1} parent=11 // pred_check
          %p272 = pneg %p131
        $region18: #{tpu_custom_call.1} parent=11 // pred_check_branch
          %274 = sbr.rel (%p272) target = $region20
        $region19: #{tpu_custom_call.1} parent=11 // pred_region
          _
        $region20: #{tpu_custom_call.1} parent=11 // pred_fallthru
          _
        // Predicated region
        $region21: #{tpu_custom_call.1} parent=11 // pred_check
          %p275 = pneg %p152
        $region22: #{tpu_custom_call.1} parent=11 // pred_check_branch
          %277 = sbr.rel (%p275) target = $region24
        $region23: #{tpu_custom_call.1} parent=11 // pred_region
          %279 = vsyncadd [#allocation6], 0
          %s280 = sshll.u32 %s4, 4
          %s281 = int_to_ptr.hbm [resolvable:$true] %s280
          %s282 = sshll.u32 [#allocation5], 4
          %s283 = int_to_ptr.vmem [resolvable:$true] %s282
          %288 = dma.hbm_to_vmem [thread:$0]  %s281, 512, %s283, [#allocation6], 128, 128, 8
        $region24: #{tpu_custom_call.1} parent=11 // pred_fallthru
          _
        // Predicated region
        $region25: #{tpu_custom_call.1} parent=11 // pred_check
          %p289 = pneg %p173
        $region26: #{tpu_custom_call.1} parent=11 // pred_check_branch
          %291 = sbr.rel (%p289) target = $region28
        $region27: #{tpu_custom_call.1} parent=11 // pred_region
          _
        $region28: #{tpu_custom_call.1} parent=11 // pred_fallthru
          _
        // Predicated region
        $region29: #{tpu_custom_call.1} parent=11 // pred_check
          %p292 = pneg %p194
        $region30: #{tpu_custom_call.1} parent=11 // pred_check_branch
          %294 = sbr.rel (%p292) target = $region32
        $region31: #{tpu_custom_call.1} parent=11 // pred_region
          _
        $region32: #{tpu_custom_call.1} parent=11 // pred_fallthru
          _
        // Predicated region
        $region33: #{tpu_custom_call.1} parent=11 // pred_check
          %p295 = pneg %p215
        $region34: #{tpu_custom_call.1} parent=11 // pred_check_branch
          %297 = sbr.rel (%p295) target = $region36
        $region35: #{tpu_custom_call.1} parent=11 // pred_region
          _
        $region36: #{tpu_custom_call.1} parent=11 // pred_fallthru
          _
      $region12: #{tpu_custom_call.1} parent=5 // pred_fallthru
        _
      %p298 = scmp.lt.s32.totalorder %s19, 2
      // Predicated region
      $region37: #{tpu_custom_call.1} parent=5 // pred_check
        %p299 = pneg %p298
      $region38: #{tpu_custom_call.1} parent=5 // pred_check_branch
        %301 = sbr.rel (%p299) target = $region40
      $region39: #{tpu_custom_call.1} parent=5 // pred_region
        // Predicated region
        $region41: #{tpu_custom_call.1} parent=39 // pred_check
          %p302 = pneg %p53
        $region42: #{tpu_custom_call.1} parent=39 // pred_check_branch
          %304 = sbr.rel (%p302) target = $region44
        $region43: #{tpu_custom_call.1} parent=39 // pred_region
          %p305 = scmp.lt.s32.totalorder %s26, 1
          %s306 = scalar_select %p305, %s26, 1
          %p307 = scmp.lt.s32.totalorder %s27, 1
          %s308 = scalar_select %p307, %s27, 1
          %s309 = smul.addr %s306, 2
          %s310 = sadd.s32 %s308, %s309
          %s311 = smul.addr %s310, 8
          %s312 = scalar_lea.vmem %s0, %s311
        $region44: #{tpu_custom_call.1} parent=39 // pred_fallthru
          _
        // Predicated region
        $region45: #{tpu_custom_call.1} parent=39 // pred_check
          %p313 = pneg %p83
        $region46: #{tpu_custom_call.1} parent=39 // pred_check_branch
          %315 = sbr.rel (%p313) target = $region48
        $region47: #{tpu_custom_call.1} parent=39 // pred_region
          %s316 = sadd.s32 %s27, 1
          %p317 = scmp.lt.s32.totalorder %s26, 1
          %s318 = scalar_select %p317, %s26, 1
          %p319 = scmp.lt.s32.totalorder %s316, 1
          %s320 = scalar_select %p319, %s316, 1
          %s321 = smul.addr %s318, 2
          %s322 = sadd.s32 %s320, %s321
          %s323 = smul.addr %s322, 8
          %s324 = scalar_lea.vmem %s1, %s323
          %s325 = sadd.s32 %s27, 1
        $region48: #{tpu_custom_call.1} parent=39 // pred_fallthru
          _
      $region40: #{tpu_custom_call.1} parent=5 // pred_fallthru
        _
      %p326 = scmp.le.s32.totalorder 1, %s19
      %p327 = scmp.lt.s32.totalorder %s19, 3
      %p328 = pnand %p326, %p327
      %p329 = pneg %p328
      // Predicated region
      $region49: #{tpu_custom_call.1} parent=5 // pred_check
        _
      $region50: #{tpu_custom_call.1} parent=5 // pred_check_branch
        %331 = sbr.rel (%p328) target = $region52
      $region51: #{tpu_custom_call.1} parent=5 // pred_region
        %s332 = ssub.s32 %s19, 1
        // Predicated region
        $region53: #{tpu_custom_call.1} parent=51 // pred_check
          %p333 = pneg %p110
        $region54: #{tpu_custom_call.1} parent=51 // pred_check_branch
          %335 = sbr.rel (%p333) target = $region56
        $region55: #{tpu_custom_call.1} parent=51 // pred_region
          %337 = dma.done [#allocation3], 512
        $region56: #{tpu_custom_call.1} parent=51 // pred_fallthru
          _
        // Predicated region
        $region57: #{tpu_custom_call.1} parent=51 // pred_check
          %p338 = pneg %p152
        $region58: #{tpu_custom_call.1} parent=51 // pred_check_branch
          %340 = sbr.rel (%p338) target = $region60
        $region59: #{tpu_custom_call.1} parent=51 // pred_region
          %342 = dma.done [#allocation6], 512
        $region60: #{tpu_custom_call.1} parent=51 // pred_fallthru
          _
        %p343 = scmp.lt.s32.totalorder %s28, 1
        %s344 = scalar_select %p343, %s28, 1
        %p345 = scmp.lt.s32.totalorder %s29, 1
        %s346 = scalar_select %p345, %s29, 1
        %s347 = smul.addr %s344, 2
        %s348 = sadd.s32 %s346, %s347
        %s349 = smul.addr %s348, 8
        %s350 = scalar_lea.vmem %s0, %s349
        %p351 = pneg %p59
        %p352 = pneg %p56
        %s353 = sadd.s32 %s29, 1
        %p354 = scmp.lt.s32.totalorder %s28, 1
        %s355 = scalar_select %p354, %s28, 1
        %p356 = scmp.lt.s32.totalorder %s353, 1
        %s357 = scalar_select %p356, %s353, 1
        %s358 = smul.addr %s355, 2
        %s359 = sadd.s32 %s357, %s358
        %s360 = smul.addr %s359, 8
        %s361 = scalar_lea.vmem %s1, %s360
        %p362 = pneg %p89
        %p363 = pneg %p86
        %p364 = pneg %p110
        %p365 = pneg %p107
        %p366 = pneg %p131
        %p367 = pneg %p128
        %p368 = pneg %p152
        %p369 = pneg %p149
        %p370 = pneg %p173
        %p371 = pneg %p170
        %p372 = pneg %p194
        %p373 = pneg %p191
        %p374 = pneg %p215
        %p375 = pneg %p212
        %p376 = pneg %p243
        %p377 = pneg %p240
        %s378 = sand.u32 %s230, 1
        %s379 = scalar_lea.sflag [#allocation4], %s378
        %s380 = sand.u32 %s230, 1
        %s381 = smul.addr %s380, 2
        %s382 = scalar_lea.vmem [#allocation7], %s381
        %p383 = scmp.lt.s32.totalorder %s28, 1
        %s384 = scalar_select %p383, %s28, 1
        %p385 = scmp.lt.s32.totalorder %s29, 1
        %s386 = scalar_select %p385, %s29, 1
        %s387 = smul.addr %s384, 2
        %s388 = sadd.s32 %s386, %s387
        %s389 = smul.addr %s388, 8
        %s390 = scalar_lea.vmem %s0, %s389
        %s391 = sadd.s32 %s29, 1
        %p392 = scmp.lt.s32.totalorder %s28, 1
        %s393 = scalar_select %p392, %s28, 1
        %p394 = scmp.lt.s32.totalorder %s391, 1
        %s395 = scalar_select %p394, %s391, 1
        %s396 = smul.addr %s393, 2
        %s397 = sadd.s32 %s395, %s396
        %s398 = smul.addr %s397, 8
        %s399 = scalar_lea.vmem %s1, %s398
        %s400 = sadd.s32 %s29, 1
        %v401 = vld [vmem:[%s390] sm:$0xff]
        %v402 = vld [vmem:[%s399] sm:$0xff]
        %405 = vrot.lane.b32.xlu0 %v401, 127
        %v406 = vpop.permute.xlu0 %405
        %407 = vrot.lane.b32.xlu0 %v402, 127
        %v408 = vpop.permute.xlu0 %407
        %vm409 = vcmask 1039360
        %v410 = vsel %vm409, %v406, %v408
        %412 = vrot.lane.b32.xlu0 %v401, 126
        %v413 = vpop.permute.xlu0 %412
        %414 = vrot.lane.b32.xlu0 %v402, 126
        %v415 = vpop.permute.xlu0 %414
        %vm416 = vcmask 1031168
        %v417 = vsel %vm416, %v413, %v415
        %419 = vrot.lane.b32.xlu0 %v401, 125
        %v420 = vpop.permute.xlu0 %419
        %421 = vrot.lane.b32.xlu0 %v402, 125
        %v422 = vpop.permute.xlu0 %421
        %vm423 = vcmask 1022976
        %v424 = vsel %vm423, %v420, %v422
        %426 = vrot.lane.b32.xlu0 %v401, 124
        %v427 = vpop.permute.xlu0 %426
        %428 = vrot.lane.b32.xlu0 %v402, 124
        %v429 = vpop.permute.xlu0 %428
        %vm430 = vcmask 1014784
        %v431 = vsel %vm430, %v427, %v429
        %433 = vrot.lane.b32.xlu0 %v401, 123
        %v434 = vpop.permute.xlu0 %433
        %435 = vrot.lane.b32.xlu0 %v402, 123
        %v436 = vpop.permute.xlu0 %435
        %vm437 = vcmask 1006592
        %v438 = vsel %vm437, %v434, %v436
        %v440 = vld [vmem:[#allocation2] sm:$0xff]
        %v441 = vld [vmem:[#allocation2 + $0x8] sm:$0xff]
        %v442 = vld [vmem:[#allocation2 + $0x10] sm:$0xff]
        %v443 = vld [vmem:[#allocation2 + $0x18] sm:$0xff]
        %v444 = vld [vmem:[%s3] sm:$0xff]
        %v445 = vld [vmem:[%s3 + $0x8] sm:$0xff]
        %v446 = vld [vmem:[%s3 + $0x10] sm:$0xff]
        %v447 = vld [vmem:[%s3 + $0x18] sm:$0xff]
        %449 = vset.pattern.permute.xlu0 0
        %450 = vperm.xlu0 %449, %v444
        %v451 = vpop.permute.xlu0 %450
        %454 = vset.pattern.permute.xlu0 0
        %455 = vperm.xlu0 %454, %v445
        %v456 = vpop.permute.xlu0 %455
        %459 = vset.pattern.permute.xlu0 0
        %460 = vperm.xlu0 %459, %v446
        %v461 = vpop.permute.xlu0 %460
        %464 = vset.pattern.permute.xlu0 0
        %465 = vperm.xlu0 %464, %v447
        %v466 = vpop.permute.xlu0 %465
        %vm468 = vcmask 392192
        %v470 = vsel %vm468, %v440, 0
        %v473 = vsel %vm468, %v441, 0
        %v476 = vsel %vm468, %v442, 0
        %v479 = vsel %vm468, %v443, 0
        %481 = vmatpush.msra.mxu0 0.0
        %482 = vmatpush.msra.mxu0 0.0
        %483 = vmatpush.msra.mxu0 0.0
        %484 = vmatpush.msra.mxu0 0.0
        %485 = vmatpush.msra.mxu0 0.0
        %486 = vmatpush.msra.mxu0 0.0
        %487 = vmatpush.msra.mxu0 0.0
        %488 = vmatpush.msra.mxu0 0.0
        %489 = vmatpush.msra.mxu0 0.0
        %490 = vmatpush.msra.mxu0 0.0
        %491 = vmatpush.msra.mxu0 %v438
        %492 = vmatpush.msra.mxu0 %v431
        %493 = vmatpush.msra.mxu0 %v424
        %494 = vmatpush.msra.mxu0 %v417
        %495 = vmatpush.msra.mxu0 %v410
        %496 = vmatpush.msra.mxu0 %v401
        %497 = vmatmul.f32.gmra.mxu0 %v470
        %v498 = vpop.f32.mrf.mxu0
        %v499 = vadd.f32 %v451, %v498
        %500 = vmatmul.f32.gmra.mxu0 %v473
        %v501 = vpop.f32.mrf.mxu0
        %v502 = vadd.f32 %v456, %v501
        %503 = vmatmul.f32.gmra.mxu0 %v476
        %v504 = vpop.f32.mrf.mxu0
        %v505 = vadd.f32 %v461, %v504
        %506 = vmatmul.f32.gmra.mxu0 %v479
        %v507 = vpop.f32.mrf.mxu0
        %v508 = vadd.f32 %v466, %v507
        %509 = vdwg.mxu0
        %v510 = vmax.f32 %v499, 0.0
        %v511 = vmax.f32 %v502, 0.0
        %v512 = vmax.f32 %v505, 0.0
        %v513 = vmax.f32 %v508, 0.0
        %v514 = vld [vmem:[#allocation5] sm:$0xff]
        %v515 = vld [vmem:[#allocation5 + $0x8] sm:$0xff]
        %v516 = vld [vmem:[#allocation5 + $0x10] sm:$0xff]
        %v517 = vld [vmem:[#allocation5 + $0x18] sm:$0xff]
        %v518 = vld [vmem:[%s5] sm:$0xff]
        %v519 = vld [vmem:[%s5 + $0x8] sm:$0xff]
        %v520 = vld [vmem:[%s5 + $0x10] sm:$0xff]
        %v521 = vld [vmem:[%s5 + $0x18] sm:$0xff]
        %523 = vset.pattern.permute.xlu0 0
        %524 = vperm.xlu0 %523, %v518
        %v525 = vpop.permute.xlu0 %524
        %528 = vset.pattern.permute.xlu0 0
        %529 = vperm.xlu0 %528, %v519
        %v530 = vpop.permute.xlu0 %529
        %533 = vset.pattern.permute.xlu0 0
        %534 = vperm.xlu0 %533, %v520
        %v535 = vpop.permute.xlu0 %534
        %538 = vset.pattern.permute.xlu0 0
        %539 = vperm.xlu0 %538, %v521
        %v540 = vpop.permute.xlu0 %539
        %vm542 = vcmask 261120
        %v544 = vsel %vm542, %v514, 0
        %v547 = vsel %vm542, %v515, 0
        %v550 = vsel %vm542, %v516, 0
        %v553 = vsel %vm542, %v517, 0
        %555 = vmatpush.msra.mxu0 0.0
        %556 = vmatpush.msra.mxu0 0.0
        %557 = vmatpush.msra.mxu0 0.0
        %558 = vmatpush.msra.mxu0 0.0
        %559 = vmatpush.msra.mxu0 0.0
        %560 = vmatpush.msra.mxu0 0.0
        %561 = vmatpush.msra.mxu0 0.0
        %562 = vmatpush.msra.mxu0 0.0
        %563 = vmatpush.msra.mxu0 0.0
        %564 = vmatpush.msra.mxu0 0.0
        %565 = vmatpush.msra.mxu0 0.0
        %566 = vmatpush.msra.mxu0 0.0
        %567 = vmatpush.msra.mxu0 %v513
        %568 = vmatpush.msra.mxu0 %v512
        %569 = vmatpush.msra.mxu0 %v511
        %570 = vmatpush.msra.mxu0 %v510
        %571 = vmatmul.f32.gmra.mxu0 %v544
        %v572 = vpop.f32.mrf.mxu0
        %v573 = vadd.f32 %v525, %v572
        %574 = vmatmul.f32.gmra.mxu0 %v547
        %v575 = vpop.f32.mrf.mxu0
        %v576 = vadd.f32 %v530, %v575
        %577 = vmatmul.f32.gmra.mxu0 %v550
        %v578 = vpop.f32.mrf.mxu0
        %v579 = vadd.f32 %v535, %v578
        %580 = vmatmul.f32.gmra.mxu0 %v553
        %v581 = vpop.f32.mrf.mxu0
        %v582 = vadd.f32 %v540, %v581
        %583 = vdwg.mxu0
        %v584 = vmax.f32 %v573, 0.0
        %v585 = vmax.f32 %v576, 0.0
        %v586 = vmax.f32 %v579, 0.0
        %v587 = vmax.f32 %v582, 0.0
        %v588 = vld [vmem:[%s6] sm:$0x3]
        %v589 = vld [vmem:[%s7] sm:$0x3]
        %591 = vset.pattern.permute.xlu0 0
        %592 = vperm.xlu0 %591, %v589
        %v593 = vpop.permute.xlu0 %592
        %v596 = vsel %vm542, %v588, 0
        %598 = vmatpush.msra.mxu0 0.0
        %599 = vmatpush.msra.mxu0 0.0
        %600 = vmatpush.msra.mxu0 0.0
        %601 = vmatpush.msra.mxu0 0.0
        %602 = vmatpush.msra.mxu0 0.0
        %603 = vmatpush.msra.mxu0 0.0
        %604 = vmatpush.msra.mxu0 0.0
        %605 = vmatpush.msra.mxu0 0.0
        %606 = vmatpush.msra.mxu0 0.0
        %607 = vmatpush.msra.mxu0 0.0
        %608 = vmatpush.msra.mxu0 0.0
        %609 = vmatpush.msra.mxu0 0.0
        %610 = vmatpush.msra.mxu0 %v587
        %611 = vmatpush.msra.mxu0 %v586
        %612 = vmatpush.msra.mxu0 %v585
        %613 = vmatpush.msra.mxu0 %v584
        %614 = vmatmul.f32.gmra.mxu0 %v596
        %v615 = vpop.f32.mrf.mxu0
        %v616 = vadd.f32 %v593, %v615
        %617 = vdwg.mxu0
        %618 = vst [vmem:[%s382] sm:$0x3] %v616
        %s619 = sand.u32 %s230, 1
        %s620 = scalar_lea.sflag [#allocation4], %s619
        %s621 = sand.u32 %s230, 1
        %s622 = smul.addr %s621, 2
        %s623 = scalar_lea.vmem [#allocation7], %s622
        // Predicated region
        $region61: #{tpu_custom_call.1} parent=51 // pred_check
          %p624 = pneg %p240
        $region62: #{tpu_custom_call.1} parent=51 // pred_check_branch
          %626 = sbr.rel (%p624) target = $region64
        $region63: #{tpu_custom_call.1} parent=51 // pred_region
          %628 = vsyncadd %s620, 0
          %s629 = sadd.s32 %s29, %s28
          %s630 = smul.addr %s629, 2
          %s631 = scalar_lea.hbm %s8, %s630
          %s633 = sshll.u32 %s623, 4
          %s634 = int_to_ptr.vmem [resolvable:$true] %s633
          %s635 = sshll.u32 %s631, 4
          %s636 = int_to_ptr.hbm [resolvable:$true] %s635
          %638 = dma.vmem_to_hbm [thread:$0]  %s634, 32, %s636, %s620
        $region64: #{tpu_custom_call.1} parent=51 // pred_fallthru
          _
      $region52: #{tpu_custom_call.1} parent=5 // pred_fallthru
        _
      %p639 = scmp.le.s32.totalorder 2, %s19
      // Predicated region
      $region65: #{tpu_custom_call.1} parent=5 // pred_check
        %p640 = pneg %p639
      $region66: #{tpu_custom_call.1} parent=5 // pred_check_branch
        %642 = sbr.rel (%p640) target = $region68
      $region67: #{tpu_custom_call.1} parent=5 // pred_region
        %s643 = ssub.s32 %s19, 2
        // Predicated region
        $region69: #{tpu_custom_call.1} parent=67 // pred_check
          %p644 = pneg %p246
        $region70: #{tpu_custom_call.1} parent=67 // pred_check_branch
          %646 = sbr.rel (%p644) target = $region72
        $region71: #{tpu_custom_call.1} parent=67 // pred_region
          %s647 = sand.u32 %s231, 1
          %s648 = scalar_lea.sflag [#allocation4], %s647
          %s649 = sand.u32 %s231, 1
          %s650 = smul.addr %s649, 2
          %s651 = scalar_lea.vmem [#allocation7], %s650
          %653 = dma.done %s648, 32
        $region72: #{tpu_custom_call.1} parent=67 // pred_fallthru
          _
      $region68: #{tpu_custom_call.1} parent=5 // pred_fallthru
        _
    $region6: #{tpu_custom_call.1} parent=1 // loop_footer
      %s23 = sadd.s32 1, %s19
    $region7: #{tpu_custom_call.1} parent=1 // loop_footer_branch
      %18 = sbr.rel target = $region3
    $region8: #{tpu_custom_call.1} parent=1 // loop_exit
      _
    %654 = vsyncpa [#allocation3], 1
    %s655 = scalar_lea.sflag [#allocation3], 1
    %656 = vsyncpa %s655, 1
    %657 = vsyncpa [#allocation6], 1
    %658 = vsyncpa [#allocation4], 1
    %s659 = scalar_lea.sflag [#allocation4], 1
    %660 = vsyncpa %s659, 1

</llo_original>
